<compile_context>
chip_gen: v6e
topology: v6e:2x2x1
jax: 0.10.0
libtpu: 0.0.40
codegen_flags: <defaults>
</compile_context>

<pallas_src>
import math
import functools

import jax
import jax.numpy as jnp
import numpy as np
from jax.experimental import pallas as pl
from jax.experimental.pallas import tpu as pltpu


def _round_up(a: int, b: int) -> int:
    return (a + b - 1) // b * b


def _pos_enc_kernel(p_ref, x_ref, pe_ref, out_ref, acc_ref, *, scale):
    # Block shapes: p (TM, 1) int32, x/out/acc (TM, Dp), pe (TV, Dp).
    v = pl.program_id(1)
    nv = pl.num_programs(1)
    TM = p_ref.shape[0]
    TV = pe_ref.shape[0]

    @pl.when(v == 0)
    def _():
        acc_ref[...] = jnp.zeros_like(acc_ref)

    # One-hot built directly in its final 2-D (TM, TV) layout (no reshapes):
    # compare the (TM, 1) padded indices against the global column index of this
    # V-chunk.  f32 one-hot keeps the MXU gather exact.
    p = p_ref[...]                                                   # (TM, 1)
    col = jax.lax.broadcasted_iota(jnp.int32, (TM, TV), 1) + v * TV  # (TM, TV)
    onehot = (p == col).astype(jnp.float32)

    # Partial gather for this V-chunk: (TM, TV) @ (TV, Dp) on the MXU.
    acc_ref[...] += jnp.dot(onehot, pe_ref[...],
                            preferred_element_type=jnp.float32)

    @pl.when(v == nv - 1)
    def _():
        out_ref[...] = (scale * x_ref[...] + acc_ref[...]).astype(out_ref.dtype)


def learned_positional_encoding(x, mask, indices, pe_table, *, tm=512, tv=512):
    """x: [B, L, D] f32, mask: [B, L] bool, indices: [B, L] int,
    pe_table: [max_len + 1, D] f32 (last row is the padding row, zeros)."""
    B, L, D = x.shape
    V = pe_table.shape[0]
    pad_idx = V - 1                      # nn.Embedding padding_idx=-1 -> max_len
    scale = float(math.sqrt(D))

    # Fold masked_fill + out-of-range clamp into the indices (plain JAX, fuses
    # upstream); the kernel then only needs a single int32 index stream.
    p = jnp.where(mask, pad_idx, indices.astype(jnp.int32))
    p = jnp.minimum(p, pad_idx)

    # Collapse B*L into one row axis.
    M = B * L
    x2 = x.reshape(M, D)
    p2 = p.reshape(M, 1)

    # Tile sizes / padding: lane-dense D (multiple of 128), TM multiple of 8,
    # V padded to a multiple of the V-chunk (extra rows are zeros, never indexed).
    Dp = _round_up(D, 128)
    TM = min(tm, _round_up(M, 8))
    Mp = _round_up(M, TM)
    TV = min(tv, _round_up(V, 8))
    Vp = _round_up(V, TV)

    x2 = jnp.pad(x2, ((0, Mp - M), (0, Dp - D)))
    p2 = jnp.pad(p2, ((0, Mp - M), (0, 0)), constant_values=pad_idx)
    pe_p = jnp.pad(pe_table, ((0, Vp - V), (0, Dp - D)))

    kernel = functools.partial(_pos_enc_kernel, scale=scale)

    out = pl.pallas_call(
        kernel,
        out_shape=jax.ShapeDtypeStruct((Mp, Dp), x.dtype),
        grid_spec=pltpu.PrefetchScalarGridSpec(
            num_scalar_prefetch=0,
            grid=(Mp // TM, Vp // TV),
            in_specs=[
                pl.BlockSpec((TM, 1), lambda m, v: (m, 0)),    # padded indices
                pl.BlockSpec((TM, Dp), lambda m, v: (m, 0)),   # x rows
                pl.BlockSpec((TV, Dp), lambda m, v: (v, 0)),   # pe V-chunk
            ],
            out_specs=pl.BlockSpec((TM, Dp), lambda m, v: (m, 0)),
            scratch_shapes=[pltpu.VMEM((TM, Dp), jnp.float32)],
        ),
        compiler_params=pltpu.CompilerParams(
            dimension_semantics=("parallel", "arbitrary"),
            vmem_limit_bytes=64 * 1024 * 1024,
        ),
    )(p2, x2, pe_p)

    return out[:M, :D].reshape(B, L, D)


def _reference(x, mask, indices, pe_table):
    V = pe_table.shape[0]
    pad = V - 1
    p = jnp.where(mask, pad, indices)
    p = jnp.where(p > pad, pad, p)
    return math.sqrt(x.shape[-1]) * x + pe_table[p]


if __name__ == "__main__":
    d_model = 32
    max_len = 64          # small synthetic max_len (module default is 5000)
    B, L = 2, 8

    key = jax.random.PRNGKey(0)
    kx, ki, km, kpe = jax.random.split(key, 4)

    x = jax.random.normal(kx, (B, L, d_model), jnp.float32)
    # a few indices exceed padding_idx to exercise the clamp path
    indices = jax.random.randint(ki, (B, L), 0, max_len + 3, dtype=jnp.int32)
    mask = jax.random.bernoulli(km, 0.25, (B, L))

    # deterministic "learned" embedding table; padding row (index max_len) is zero,
    # as nn.Embedding(padding_idx=-1) initializes it.
    pe_table = jax.random.normal(kpe, (max_len + 1, d_model), jnp.float32)
    pe_table = pe_table.at[max_len].set(0.0)

    out = learned_positional_encoding(x, mask, indices, pe_table)
    out = jax.block_until_ready(out)

    ref = _reference(x, mask, indices, pe_table)
    assert np.allclose(np.asarray(out), np.asarray(ref), rtol=1e-5, atol=1e-5), "mismatch vs reference"
    print("KERNEL_OK")
</pallas_src>

<mosaic_0001>
module attributes {stable_mosaic.version = 11 : i64} {
  func.func @_pos_enc_kernel(%arg0: i32, %arg1: i32, %arg2: memref<16x1xi32, #tpu.memory_space<vmem>>, %arg3: memref<16x128xf32, #tpu.memory_space<vmem>>, %arg4: memref<72x128xf32, #tpu.memory_space<vmem>>, %arg5: memref<16x128xf32, #tpu.memory_space<vmem>>, %arg6: memref<16x128xf32, #tpu.memory_space<vmem>>) attributes {dimension_semantics = [#tpu.dimension_semantics<parallel>, #tpu.dimension_semantics<arbitrary>], iteration_bounds = array<i64: 1, 1>, scalar_prefetch = 0 : i64, scratch_operands = 1 : i64, tpu.core_type = #tpu.core_type<tc>, window_params = [{transform_indices = @transform_0, window_bounds = array<i64: 16, 1>}, {transform_indices = @transform_1, window_bounds = array<i64: 16, 128>}, {transform_indices = @transform_2, window_bounds = array<i64: 72, 128>}, {transform_indices = @transform_3, window_bounds = array<i64: 16, 128>}]} {
    %c0_i32 = arith.constant 0 : i32
    %0 = arith.cmpi eq, %arg1, %c0_i32 : i32
    %1 = arith.extui %0 : i1 to i32
    %c0_i32_0 = arith.constant 0 : i32
    %2 = arith.cmpi ne, %1, %c0_i32_0 : i32
    scf.if %2 {
      %cst_10 = arith.constant 0.000000e+00 : f32
      %20 = vector.broadcast %cst_10 : f32 to vector<16x128xf32>
      %c0_11 = arith.constant 0 : index
      %c0_12 = arith.constant 0 : index
      %21 = vector.load %arg6[%c0_11, %c0_12] : memref<16x128xf32, #tpu.memory_space<vmem>>, vector<16x128xf32>
      tpu.vector_store %arg6[%c0_11, %c0_12], %20 {strides = array<i32>} : memref<16x128xf32, #tpu.memory_space<vmem>>, vector<16x128xf32>,
    } else {
    }
    %c0 = arith.constant 0 : index
    %c0_1 = arith.constant 0 : index
    %3 = vector.load %arg2[%c0, %c0_1] : memref<16x1xi32, #tpu.memory_space<vmem>>, vector<16x1xi32>
    %4 = tpu.iota {dimensions = array<i32: 1>} : vector<16x72xi32>
    %c72_i32 = arith.constant 72 : i32
    %5 = arith.muli %arg1, %c72_i32 : i32
    %6 = vector.broadcast %5 : i32 to vector<16x72xi32>
    %7 = arith.addi %4, %6 : vector<16x72xi32>
    %8 = vector.broadcast %3 : vector<16x1xi32> to vector<16x72xi32>
    %9 = arith.cmpi eq, %8, %7 : vector<16x72xi32>
    %10 = arith.extui %9 : vector<16x72xi1> to vector<16x72xi32>
    %11 = arith.sitofp %10 : vector<16x72xi32> to vector<16x72xf32>
    %c0_2 = arith.constant 0 : index
    %c0_3 = arith.constant 0 : index
    %12 = vector.load %arg6[%c0_2, %c0_3] : memref<16x128xf32, #tpu.memory_space<vmem>>, vector<16x128xf32>
    %c0_4 = arith.constant 0 : index
    %c0_5 = arith.constant 0 : index
    %13 = vector.load %arg4[%c0_4, %c0_5] : memref<72x128xf32, #tpu.memory_space<vmem>>, vector<72x128xf32>
    %cst = arith.constant dense<0.000000e+00> : vector<16x128xf32>
    %14 = tpu.matmul %11, %13, %cst {dimension_numbers = #tpu.dot_dimension_numbers<[1], [0], [0], [1], [0, 0, 1, 1], [], []>} : vector<16x72xf32>, vector<72x128xf32>, vector<16x128xf32> -> vector<16x128xf32>
    %15 = arith.addf %12, %14 : vector<16x128xf32>
    %c0_6 = arith.constant 0 : index
    %c0_7 = arith.constant 0 : index
    %16 = vector.load %arg6[%c0_6, %c0_7] : memref<16x128xf32, #tpu.memory_space<vmem>>, vector<16x128xf32>
    tpu.vector_store %arg6[%c0_6, %c0_7], %15 {strides = array<i32>} : memref<16x128xf32, #tpu.memory_space<vmem>>, vector<16x128xf32>,
    %c0_i32_8 = arith.constant 0 : i32
    %17 = arith.cmpi eq, %arg1, %c0_i32_8 : i32
    %18 = arith.extui %17 : i1 to i32
    %c0_i32_9 = arith.constant 0 : i32
    %19 = arith.cmpi ne, %18, %c0_i32_9 : i32
    scf.if %19 {
      %c0_10 = arith.constant 0 : index
      %c0_11 = arith.constant 0 : index
      %20 = vector.load %arg3[%c0_10, %c0_11] : memref<16x128xf32, #tpu.memory_space<vmem>>, vector<16x128xf32>
      %cst_12 = arith.constant 5.65685415 : f32
      %21 = vector.broadcast %cst_12 : f32 to vector<16x128xf32>
      %22 = arith.mulf %21, %20 : vector<16x128xf32>
      %c0_13 = arith.constant 0 : index
      %c0_14 = arith.constant 0 : index
      %23 = vector.load %arg6[%c0_13, %c0_14] : memref<16x128xf32, #tpu.memory_space<vmem>>, vector<16x128xf32>
      %24 = arith.addf %22, %23 : vector<16x128xf32>
      %c0_15 = arith.constant 0 : index
      %c0_16 = arith.constant 0 : index
      %25 = vector.load %arg5[%c0_15, %c0_16] : memref<16x128xf32, #tpu.memory_space<vmem>>, vector<16x128xf32>
      tpu.vector_store %arg5[%c0_15, %c0_16], %24 {strides = array<i32>} : memref<16x128xf32, #tpu.memory_space<vmem>>, vector<16x128xf32>,
    } else {
    }
    return
  }
  func.func @transform_0(%arg0: i32, %arg1: i32) -> (i32, i32) {
    %c0_i32 = arith.constant 0 : i32
    %c0_i32_0 = arith.constant 0 : i32
    return %arg0, %c0_i32 : i32, i32
  }
  func.func @transform_1(%arg0: i32, %arg1: i32) -> (i32, i32) {
    %c0_i32 = arith.constant 0 : i32
    %c0_i32_0 = arith.constant 0 : i32
    return %arg0, %c0_i32 : i32, i32
  }
  func.func @transform_2(%arg0: i32, %arg1: i32) -> (i32, i32) {
    %c0_i32 = arith.constant 0 : i32
    %c0_i32_0 = arith.constant 0 : i32
    return %arg1, %c0_i32 : i32, i32
  }
  func.func @transform_3(%arg0: i32, %arg1: i32) -> (i32, i32) {
    %c0_i32 = arith.constant 0 : i32
    %c0_i32_0 = arith.constant 0 : i32
    return %arg0, %c0_i32 : i32, i32
  }
}

</mosaic_0001>

<llo_original>
// kernel: tpu_custom_call.1
$region0: #{tpu_custom_call.1}
  #allocation0 [shape = 'u32[]', space=smem, size = 0x4, offset = 0x4, fixed_abs, tag = 'smem constant byte address 0x4 - core index']
  #allocation1 [shape = 'u32[144,128]{1,0:T(1,128)}', space=vmem, size = 0x12000, scoped, tag = 'internal scratch']
  #allocation2 [shape = 'f32[16,128]{1,0:T(8,128)}', space=vmem, size = 0x2000, scoped, tag = 'scratch operand']
  %s0 = inlined_call_operand.vmem [shape: s32[16,1], index: 0, kind: input, shape index: {}]
  %s1 = inlined_call_operand.vmem [shape: f32[16,128], index: 1, kind: input, shape index: {}]
  %s2 = inlined_call_operand.hbm [shape: f32[72,128], index: 2, kind: input, shape index: {}]
  %s3 = inlined_call_operand.hbm [shape: f32[16,128], index: 3, kind: output, shape index: {}]
  %s4 = sld [smem:[#allocation0]]
  $region34: #{tpu_custom_call.1} parent=0
    _
  %s6 = ssub.s32 1, %s4
  %s7 = scalar_select 0, %s6, %s4
  $region1: #{tpu_custom_call.1} parent=0
    #allocation3 [shape = 'u8[36864]{0}', space=vmem, size = 0x9000, scoped, tag = 'input window, operand 2, single buffered']
    #allocation4 [shape = 's32[1]{0}', space=sflag, size = 0x4, scoped, tag = 'scoped memory for tpu_custom_call.1']
    #allocation5 [shape = 's32[1]{0}', space=sflag, size = 0x4, scoped, tag = 'scoped memory for tpu_custom_call.1']
    #allocation6 [shape = 'u8[8192]{0}', space=vmem, size = 0x2000, scoped, tag = 'output window, operand 0, single buffered']
    %8 = vsyncpa [#allocation4], 0
    %9 = vsyncpa [#allocation5], 0
    // Predicated region
    $region2: #{tpu_custom_call.1} parent=1 // pred_check
      _
    $region3: #{tpu_custom_call.1} parent=1 // pred_check_branch
      %11 = sbr.rel (0) target = $region5
    $region4: #{tpu_custom_call.1} parent=1 // pred_region
      _
    $region5: #{tpu_custom_call.1} parent=1 // pred_fallthru
      _
    // Predicated region
    $region6: #{tpu_custom_call.1} parent=1 // pred_check
      _
    $region7: #{tpu_custom_call.1} parent=1 // pred_check_branch
      %13 = sbr.rel (0) target = $region9
    $region8: #{tpu_custom_call.1} parent=1 // pred_region
      _
    $region9: #{tpu_custom_call.1} parent=1 // pred_fallthru
      _
    // Predicated region
    $region10: #{tpu_custom_call.1} parent=1 // pred_check
      _
    $region11: #{tpu_custom_call.1} parent=1 // pred_check_branch
      %15 = sbr.rel (0) target = $region13
    $region12: #{tpu_custom_call.1} parent=1 // pred_region
      %s17 = ssub.s32 1152, 1152
      %18 = vsyncadd [#allocation4], %s17
      %s19 = sshll.u32 [#allocation3], 4
      %s20 = int_to_ptr.vmem [resolvable:$true] %s19
      %25 = dma.hbm_to_vmem [thread:$0]  %s2, 1152, %s20, [#allocation4], 128, 128, 8
    $region13: #{tpu_custom_call.1} parent=1 // pred_fallthru
      _
    // Predicated region
    $region14: #{tpu_custom_call.1} parent=1 // pred_check
      _
    $region15: #{tpu_custom_call.1} parent=1 // pred_check_branch
      %27 = sbr.rel (0) target = $region17
    $region16: #{tpu_custom_call.1} parent=1 // pred_region
      %28 = dma.done [#allocation4], 1152
    $region17: #{tpu_custom_call.1} parent=1 // pred_fallthru
      _
    %p29 = scmp.eq.s32.totalorder 0, 0
    // Predicated region
    $region18: #{tpu_custom_call.1} parent=1 // pred_check
      %p30 = pneg %p29
    $region19: #{tpu_custom_call.1} parent=1 // pred_check_branch
      %32 = sbr.rel (%p30) target = $region21
    $region20: #{tpu_custom_call.1} parent=1 // pred_region
      %33 = vst [vmem:[#allocation2] sm:$0xff] 0.0
      %34 = vst [vmem:[#allocation2 + $0x8] sm:$0xff] 0.0
    $region21: #{tpu_custom_call.1} parent=1 // pred_fallthru
      _
    %v35 = vld [vmem:[%s0] sm:$0xff]
    %v36 = vld [vmem:[%s0 + $0x8] sm:$0xff]
    %v37 = vlaneseq
    %v38 = vand.u32 %v37, 127
    %s39 = smul.u32 0, 72
    %v40 = vstv %s39
    %v41 = vadd.s32 %v38, %v40
    %42 = vset.pattern.permute.xlu0 0
    %43 = vperm.xlu0 %42, %v35
    %v44 = vpop.permute.xlu0 %43
    %45 = vset.pattern.permute.xlu0 0
    %46 = vperm.xlu0 %45, %v36
    %v47 = vpop.permute.xlu0 %46
    %vm48 = vcmp.eq.s32.totalorder %v44, %v41
    %vm49 = vcmp.eq.s32.totalorder %v47, %v41
    %v50 = vsel %vm48, 1, 0
    %v51 = vsel %vm49, 1, 0
    %v52 = vcvt.s32.f32 %v50
    %v53 = vcvt.s32.f32 %v51
    %v54 = vld [vmem:[#allocation2] sm:$0xff]
    %v55 = vld [vmem:[#allocation2 + $0x8] sm:$0xff]
    %v56 = vld [vmem:[#allocation3] sm:$0xff]
    %v57 = vld [vmem:[#allocation3 + $0x8] sm:$0xff]
    %v58 = vld [vmem:[#allocation3 + $0x10] sm:$0xff]
    %v59 = vld [vmem:[#allocation3 + $0x18] sm:$0xff]
    %v60 = vld [vmem:[#allocation3 + $0x20] sm:$0xff]
    %v61 = vld [vmem:[#allocation3 + $0x28] sm:$0xff]
    %v62 = vld [vmem:[#allocation3 + $0x30] sm:$0xff]
    %v63 = vld [vmem:[#allocation3 + $0x38] sm:$0xff]
    %v64 = vld [vmem:[#allocation3 + $0x40] sm:$0xff]
    %vm65 = vcmask 588800
    %v67 = vsel %vm65, %v52, 0
    %v70 = vsel %vm65, %v53, 0
    %72 = vmatprep.subr.mxu0 0.0
    %73 = vmatpush1.msra.mxu0 0.0
    %74 = vmatprep.subr.mxu0 0.0
    %75 = vmatpush1.msra.mxu0 0.0
    %76 = vmatprep.subr.mxu0 0.0
    %77 = vmatpush1.msra.mxu0 0.0
    %78 = vmatprep.subr.mxu0 0.0
    %79 = vmatpush1.msra.mxu0 0.0
    %80 = vmatprep.subr.mxu0 0.0
    %81 = vmatpush1.msra.mxu0 0.0
    %82 = vmatprep.subr.mxu0 0.0
    %83 = vmatpush1.msra.mxu0 0.0
    %84 = vmatprep.subr.mxu0 0.0
    %85 = vmatpush1.msra.mxu0 0.0
    %86 = vmatprep.subr.mxu0 0.0
    %87 = vmatpush1.msra.mxu0 %v64
    %88 = vmatprep.subr.mxu0 0.0
    %89 = vmatpush1.msra.mxu0 %v63
    %90 = vmatprep.subr.mxu0 0.0
    %91 = vmatpush1.msra.mxu0 %v62
    %92 = vmatprep.subr.mxu0 0.0
    %93 = vmatpush1.msra.mxu0 %v61
    %94 = vmatprep.subr.mxu0 0.0
    %95 = vmatpush1.msra.mxu0 %v60
    %96 = vmatprep.subr.mxu0 0.0
    %97 = vmatpush1.msra.mxu0 %v59
    %98 = vmatprep.subr.mxu0 0.0
    %99 = vmatpush1.msra.mxu0 %v58
    %100 = vmatprep.subr.mxu0 0.0
    %101 = vmatpush1.msra.mxu0 %v57
    %102 = vmatprep.subr.mxu0 0.0
    %103 = vmatpush1.msra.mxu0 %v56
    %104 = vmatprep.subr.mxu0 0.0
    %105 = vmatpush2.msra.mxu0 0.0
    %106 = vmatprep.subr.mxu0 0.0
    %107 = vmatpush2.msra.mxu0 0.0
    %108 = vmatprep.subr.mxu0 0.0
    %109 = vmatpush2.msra.mxu0 0.0
    %110 = vmatprep.subr.mxu0 0.0
    %111 = vmatpush2.msra.mxu0 0.0
    %112 = vmatprep.subr.mxu0 0.0
    %113 = vmatpush2.msra.mxu0 0.0
    %114 = vmatprep.subr.mxu0 0.0
    %115 = vmatpush2.msra.mxu0 0.0
    %116 = vmatprep.subr.mxu0 0.0
    %117 = vmatpush2.msra.mxu0 0.0
    %118 = vmatprep.subr.mxu0 0.0
    %119 = vmatpush2.msra.mxu0 0.0
    %120 = vmatprep.subr.mxu0 0.0
    %121 = vmatpush2.msra.mxu0 0.0
    %122 = vmatprep.subr.mxu0 0.0
    %123 = vmatpush2.msra.mxu0 0.0
    %124 = vmatprep.subr.mxu0 0.0
    %125 = vmatpush2.msra.mxu0 0.0
    %126 = vmatprep.subr.mxu0 0.0
    %127 = vmatpush2.msra.mxu0 0.0
    %128 = vmatprep.subr.mxu0 0.0
    %129 = vmatpush2.msra.mxu0 0.0
    %130 = vmatprep.subr.mxu0 0.0
    %131 = vmatpush2.msra.mxu0 0.0
    %132 = vmatprep.subr.mxu0 0.0
    %133 = vmatpush2.msra.mxu0 0.0
    %134 = vmatprep.subr.mxu0 0.0
    %135 = vmatpush2.msra.mxu0 0.0
    %136 = vmatprep.mubr.f32.mxu0 0.0
    %137 = vmatmul.mubr.f32.gmra.mxu0 %v67
    %v138 = vpop.f32.mrf.mxu0
    %v139 = vadd.f32 0.0, %v138
    %v140 = vpop.f32.mrf.mxu0
    %141 = vmatprep.mubr.f32.mxu0 0.0
    %142 = vmatmul.mubr.f32.gmra.mxu0 %v70
    %v143 = vpop.f32.mrf.mxu0
    %v144 = vadd.f32 0.0, %v143
    %v145 = vpop.f32.mrf.mxu0
    %146 = vdwg.mxu0
    %v147 = vadd.f32 %v54, %v139
    %v148 = vadd.f32 %v55, %v144
    %149 = vst [vmem:[#allocation2] sm:$0xff] %v147
    %150 = vst [vmem:[#allocation2 + $0x8] sm:$0xff] %v148
    // Predicated region
    $region22: #{tpu_custom_call.1} parent=1 // pred_check
      %p151 = pneg %p29
    $region23: #{tpu_custom_call.1} parent=1 // pred_check_branch
      %153 = sbr.rel (%p151) target = $region25
    $region24: #{tpu_custom_call.1} parent=1 // pred_region
      %v154 = vld [vmem:[%s1] sm:$0xff]
      %v155 = vld [vmem:[%s1 + $0x8] sm:$0xff]
      %v156 = vmul.f32 %v154, 5.656854
      %v157 = vmul.f32 %v155, 5.656854
      %v158 = vld [vmem:[#allocation2] sm:$0xff]
      %v159 = vld [vmem:[#allocation2 + $0x8] sm:$0xff]
      %v160 = vadd.f32 %v156, %v158
      %v161 = vadd.f32 %v157, %v159
      %162 = vst [vmem:[#allocation6] sm:$0xff] %v160
      %163 = vst [vmem:[#allocation6 + $0x8] sm:$0xff] %v161
    $region25: #{tpu_custom_call.1} parent=1 // pred_fallthru
      _
    // Predicated region
    $region26: #{tpu_custom_call.1} parent=1 // pred_check
      _
    $region27: #{tpu_custom_call.1} parent=1 // pred_check_branch
      %165 = sbr.rel (0) target = $region29
    $region28: #{tpu_custom_call.1} parent=1 // pred_region
      %s167 = ssub.s32 256, 256
      %168 = vsyncadd [#allocation5], %s167
      %s169 = sshll.u32 [#allocation6], 4
      %s170 = int_to_ptr.vmem [resolvable:$true] %s169
      %175 = dma.vmem_to_hbm [thread:$0]  %s170, 256, %s3, [#allocation5], 128, 128, 8
    $region29: #{tpu_custom_call.1} parent=1 // pred_fallthru
      _
    // Predicated region
    $region30: #{tpu_custom_call.1} parent=1 // pred_check
      _
    $region31: #{tpu_custom_call.1} parent=1 // pred_check_branch
      %177 = sbr.rel (0) target = $region33
    $region32: #{tpu_custom_call.1} parent=1 // pred_region
      %178 = dma.done [#allocation5], 256
    $region33: #{tpu_custom_call.1} parent=1 // pred_fallthru
      _
    %179 = vsyncpa [#allocation4], 1
    %180 = vsyncpa [#allocation5], 1

</llo_original>
